<compile_context>
chip_gen: v5e
topology: v5e:2x2
jax: 0.10.0
libtpu: 0.0.40
codegen_flags: <defaults>
</compile_context>

<pallas_src>
import jax
import jax.numpy as jnp
from jax.experimental import pallas as pl
from jax.experimental.pallas import tpu as pltpu


IN_FEATURES = 784
OUT_FEATURES = 10
PAD_CLASSES = 128          # lane-pad the class dim for full-lane MXU/reductions
NEG_BIG = -1e30            # ~ -inf bias for padded logits (exp underflows to 0)


def _round_up(x, m):
    return ((x + m - 1) // m) * m


def mocknet_kernel(x_ref, w_ref, b_ref, o_ref):
    # x_ref: (TM, 784)   w_ref: (784, 128)   b_ref: (1, 128)   o_ref: (TM, 10)
    x = x_ref[...]
    w = w_ref[...]
    b = b_ref[...]
    if b.dtype != jnp.float32:
        b = b.astype(jnp.float32)

    # Linear on the MXU with f32 accumulation.  Padded columns (10..127) have
    # zero weights and -1e30 bias -> their exp() underflows to exactly 0.
    logits = jnp.dot(x, w, preferred_element_type=jnp.float32) + b   # (TM, 128)

    # Numerically-stable row softmax over the full 128 lanes.
    m = jnp.max(logits, axis=1, keepdims=True)
    e = jnp.exp(logits - m)
    denom = jnp.sum(e, axis=1, keepdims=True)
    probs = e / denom                                    # exact normalization

    # Store only the 10 real classes (HBM output remains (B, 10)).
    o_ref[...] = probs[:, :OUT_FEATURES].astype(o_ref.dtype)


def prepare_mocknet_params(weight, bias):
    """Hoisted out of the per-call path: transpose + lane-pad done once."""
    w_pad = jnp.zeros((IN_FEATURES, PAD_CLASSES), dtype=weight.dtype)
    w_pad = w_pad.at[:, :OUT_FEATURES].set(weight.T)
    b_pad = jnp.full((1, PAD_CLASSES), NEG_BIG, dtype=jnp.float32)
    b_pad = b_pad.at[:, :OUT_FEATURES].set(bias.astype(jnp.float32))
    return w_pad, b_pad


def _pick_tile(batch, tm_max):
    if batch <= 1024:
        return batch                      # single tile, block == full dim
    # Large batch: keep tiles big (amortize ~0.35us per-step overhead) but
    # guarantee grid >= 2 so both v7x TensorCores pull from HBM.
    return min(tm_max, max(1024, _round_up(pl.cdiv(batch, 2), 8)))


def mocknet_forward(x_nchw, w_pad, b_pad, *, tm_max=4096, tm_override=None):
    """x_nchw: (B, 1, 28, 28). w_pad/b_pad from prepare_mocknet_params."""
    B = x_nchw.shape[0]
    x_flat = x_nchw.reshape(B, IN_FEATURES)              # x.view(-1, 784)
    tm = tm_override if tm_override is not None else _pick_tile(B, tm_max)
    grid = (pl.cdiv(B, tm),)

    # Scoped-VMEM budget: double-buffered x tile dominates (W/bias/out tiny).
    itemsize = x_flat.dtype.itemsize
    vmem_needed = (2 * tm * IN_FEATURES * itemsize
                   + 2 * IN_FEATURES * PAD_CLASSES * w_pad.dtype.itemsize
                   + 2 * PAD_CLASSES * 4
                   + 2 * tm * OUT_FEATURES * 4)
    vmem_limit = min(max(32 << 20, int(vmem_needed * 1.25) + (2 << 20)),
                     60 << 20)   # stay under v7x's 64 MiB physical VMEM

    cost = pl.CostEstimate(
        flops=2 * B * IN_FEATURES * OUT_FEATURES,
        transcendentals=B * PAD_CLASSES,
        bytes_accessed=(B * IN_FEATURES * itemsize
                        + IN_FEATURES * PAD_CLASSES * w_pad.dtype.itemsize
                        + B * OUT_FEATURES * 4),
    )

    return pl.pallas_call(
        mocknet_kernel,
        out_shape=jax.ShapeDtypeStruct((B, OUT_FEATURES), jnp.float32),
        grid=grid,
        in_specs=[
            # x: streamed tile-by-tile over the batch axis (double-buffered).
            pl.BlockSpec((tm, IN_FEATURES), lambda i: (i, 0)),
            # W and bias: constant block index -> VMEM-resident.
            pl.BlockSpec((IN_FEATURES, PAD_CLASSES), lambda i: (0, 0)),
            pl.BlockSpec((1, PAD_CLASSES), lambda i: (0, 0)),
        ],
        out_specs=pl.BlockSpec((tm, OUT_FEATURES), lambda i: (i, 0)),
        compiler_params=pltpu.CompilerParams(
            dimension_semantics=("parallel",),
            vmem_limit_bytes=vmem_limit,
        ),
        cost_estimate=cost,
    )(x_flat, w_pad, b_pad)


if __name__ == "__main__":
    key = jax.random.PRNGKey(0)
    kx, kw, kb = jax.random.split(key, 3)

    # Deterministic params mimicking nn.Linear(784, 10) default init
    # (uniform in [-1/sqrt(784), 1/sqrt(784)]).
    bound = 1.0 / (IN_FEATURES ** 0.5)
    weight = jax.random.uniform(kw, (OUT_FEATURES, IN_FEATURES),
                                minval=-bound, maxval=bound, dtype=jnp.float32)
    bias = jax.random.uniform(kb, (OUT_FEATURES,),
                              minval=-bound, maxval=bound, dtype=jnp.float32)
    w_pad, b_pad = prepare_mocknet_params(weight, bias)

    def ref_fn(xin):
        return jax.nn.softmax(
            xin.reshape(-1, IN_FEATURES) @ weight.T + bias, axis=1)

    # 1) Small batch, single tile (grid=(1,)).
    B = 8
    x = jax.random.normal(kx, (B, 1, 28, 28), dtype=jnp.float32)
    out = jax.block_until_ready(mocknet_forward(x, w_pad, b_pad))
    ref = ref_fn(x)
    assert out.shape == (B, OUT_FEATURES)
    assert jnp.allclose(out, ref, atol=1e-4, rtol=1e-4), "mismatch vs reference (B=8)"
    assert jnp.allclose(jnp.sum(out, axis=1), 1.0, atol=1e-4)

    # 2) Multi-tile + ragged last tile (grid=(3,), last tile partial).
    B2 = 20
    x2 = jax.random.normal(kx, (B2, 1, 28, 28), dtype=jnp.float32)
    out2 = jax.block_until_ready(
        mocknet_forward(x2, w_pad, b_pad, tm_override=8))
    ref2 = ref_fn(x2)
    assert out2.shape == (B2, OUT_FEATURES)
    assert jnp.allclose(out2, ref2, atol=1e-4, rtol=1e-4), "mismatch vs reference (B=20)"
    assert jnp.allclose(jnp.sum(out2, axis=1), 1.0, atol=1e-4)

    print("KERNEL_OK")
</pallas_src>

<mosaic_0001>
module attributes {stable_mosaic.version = 11 : i64} {
  func.func @mocknet_kernel(%arg0: i32, %arg1: memref<8x784xf32, #tpu.memory_space<vmem>>, %arg2: memref<784x128xf32, #tpu.memory_space<vmem>>, %arg3: memref<1x128xf32, #tpu.memory_space<vmem>>, %arg4: memref<8x10xf32, #tpu.memory_space<vmem>>) attributes {dimension_semantics = [#tpu.dimension_semantics<parallel>], iteration_bounds = array<i64: 1>, scalar_prefetch = 0 : i64, scratch_operands = 0 : i64, tpu.core_type = #tpu.core_type<tc>, window_params = [{transform_indices = @transform_0, window_bounds = array<i64: 8, 784>}, {pipeline_mode = #tpu.pipeline_mode<synchronous>, transform_indices = @transform_1, window_bounds = array<i64: 784, 128>}, {pipeline_mode = #tpu.pipeline_mode<synchronous>, transform_indices = @transform_2, window_bounds = array<i64: 1, 128>}, {transform_indices = @transform_3, window_bounds = array<i64: 8, 10>}]} {
    %c0 = arith.constant 0 : index
    %c0_0 = arith.constant 0 : index
    %0 = vector.load %arg1[%c0, %c0_0] : memref<8x784xf32, #tpu.memory_space<vmem>>, vector<8x784xf32>
    %c0_1 = arith.constant 0 : index
    %c0_2 = arith.constant 0 : index
    %1 = vector.load %arg2[%c0_1, %c0_2] : memref<784x128xf32, #tpu.memory_space<vmem>>, vector<784x128xf32>
    %c0_3 = arith.constant 0 : index
    %c0_4 = arith.constant 0 : index
    %2 = vector.load %arg3[%c0_3, %c0_4] : memref<1x128xf32, #tpu.memory_space<vmem>>, vector<1x128xf32>
    %cst = arith.constant dense<0.000000e+00> : vector<8x128xf32>
    %3 = tpu.matmul %0, %1, %cst {dimension_numbers = #tpu.dot_dimension_numbers<[1], [0], [0], [1], [0, 0, 1, 1], [], []>} : vector<8x784xf32>, vector<784x128xf32>, vector<8x128xf32> -> vector<8x128xf32>
    %4 = vector.broadcast %2 : vector<1x128xf32> to vector<8x128xf32>
    %5 = arith.addf %3, %4 : vector<8x128xf32>
    %cst_5 = arith.constant dense<0xFF800000> : vector<8xf32>
    %6 = vector.multi_reduction <maximumf>, %5, %cst_5 [1] : vector<8x128xf32> to vector<8xf32>
    %7 = vector.shape_cast %6 : vector<8xf32> to vector<8x1xf32>
    %8 = vector.broadcast %7 : vector<8x1xf32> to vector<8x128xf32>
    %9 = arith.subf %5, %8 : vector<8x128xf32>
    %10 = math.exp %9 : vector<8x128xf32>
    %cst_6 = arith.constant dense<0.000000e+00> : vector<8xf32>
    %11 = vector.multi_reduction <add>, %10, %cst_6 [1] : vector<8x128xf32> to vector<8xf32>
    %12 = vector.shape_cast %11 : vector<8xf32> to vector<8x1xf32>
    %13 = vector.broadcast %12 : vector<8x1xf32> to vector<8x128xf32>
    %14 = arith.divf %10, %13 : vector<8x128xf32>
    %15 = vector.extract_strided_slice %14 {offsets = [0, 0], sizes = [8, 10], strides = [1, 1]} : vector<8x128xf32> to vector<8x10xf32>
    %c0_7 = arith.constant 0 : index
    %c0_8 = arith.constant 0 : index
    %16 = vector.load %arg4[%c0_7, %c0_8] : memref<8x10xf32, #tpu.memory_space<vmem>>, vector<8x10xf32>
    tpu.vector_store %arg4[%c0_7, %c0_8], %15 {strides = array<i32>} : memref<8x10xf32, #tpu.memory_space<vmem>>, vector<8x10xf32>,
    return
  }
  func.func @transform_0(%arg0: i32) -> (i32, i32) {
    %c0_i32 = arith.constant 0 : i32
    %c0_i32_0 = arith.constant 0 : i32
    return %arg0, %c0_i32 : i32, i32
  }
  func.func @transform_1(%arg0: i32) -> (i32, i32) {
    %c0_i32 = arith.constant 0 : i32
    %c0_i32_0 = arith.constant 0 : i32
    %c0_i32_1 = arith.constant 0 : i32
    return %c0_i32, %c0_i32_0 : i32, i32
  }
  func.func @transform_2(%arg0: i32) -> (i32, i32) {
    %c0_i32 = arith.constant 0 : i32
    %c0_i32_0 = arith.constant 0 : i32
    %c0_i32_1 = arith.constant 0 : i32
    return %c0_i32, %c0_i32_0 : i32, i32
  }
  func.func @transform_3(%arg0: i32) -> (i32, i32) {
    %c0_i32 = arith.constant 0 : i32
    %c0_i32_0 = arith.constant 0 : i32
    return %arg0, %c0_i32 : i32, i32
  }
}

</mosaic_0001>

<llo_original>
// kernel: tpu_custom_call.1
$region0: #{tpu_custom_call.1}
  #allocation0 [shape = 'u32[]', space=smem, size = 0x4, offset = 0x4, fixed_abs, tag = 'smem constant byte address 0x4 - core index']
  #allocation1 [shape = 'u32[72,128]{1,0:T(1,128)}', space=vmem, size = 0x9000, scoped, tag = 'internal scratch']
  %s0 = inlined_call_operand.hbm [shape: f32[8,784], index: 0, kind: input, shape index: {}]
  %s1 = inlined_call_operand.hbm [shape: f32[784,128], index: 1, kind: input, shape index: {}]
  %s2 = inlined_call_operand.vmem [shape: f32[1,128], index: 2, kind: input, shape index: {}]
  %s3 = inlined_call_operand.hbm [shape: f32[8,10], index: 3, kind: output, shape index: {}]
  %s4 = sld [smem:[#allocation0]]
  $region30: #{tpu_custom_call.1} parent=0
    _
  %s6 = ssub.s32 1, %s4
  %s7 = scalar_select 0, %s6, %s4
  $region1: #{tpu_custom_call.1} parent=0
    #allocation2 [shape = 'u8[28672]{0}', space=vmem, size = 0x7000, scoped, tag = 'input window, operand 0, single buffered']
    #allocation3 [shape = 's32[1]{0}', space=sflag, size = 0x4, scoped, tag = 'scoped memory for tpu_custom_call.1']
    #allocation4 [shape = 's32[1]{0}', space=sflag, size = 0x4, scoped, tag = 'scoped memory for tpu_custom_call.1']
    #allocation5 [shape = 'u8[401408]{0}', space=vmem, size = 0x62000, scoped, tag = 'input window, operand 1, single buffered']
    #allocation6 [shape = 's32[1]{0}', space=sflag, size = 0x4, scoped, tag = 'scoped memory for tpu_custom_call.1']
    #allocation7 [shape = 'u8[4096]{0}', space=vmem, size = 0x1000, scoped, tag = 'output window, operand 0, single buffered']
    %8 = vsyncpa [#allocation3], 0
    %9 = vsyncpa [#allocation6], 0
    %10 = vsyncpa [#allocation4], 0
    // Predicated region
    $region2: #{tpu_custom_call.1} parent=1 // pred_check
      _
    $region3: #{tpu_custom_call.1} parent=1 // pred_check_branch
      %12 = sbr.rel (0) target = $region5
    $region4: #{tpu_custom_call.1} parent=1 // pred_region
      %14 = vsyncadd [#allocation3], 0
      %s16 = sshll.u32 %s0, 4
      %s17 = int_to_ptr.hbm [resolvable:$true] %s16
      %s18 = sshll.u32 [#allocation2], 4
      %s19 = int_to_ptr.vmem [resolvable:$true] %s18
      %21 = dma.hbm_to_vmem [thread:$0]  %s17, 896, %s19, [#allocation3]
    $region5: #{tpu_custom_call.1} parent=1 // pred_fallthru
      _
    // Predicated region
    $region6: #{tpu_custom_call.1} parent=1 // pred_check
      _
    $region7: #{tpu_custom_call.1} parent=1 // pred_check_branch
      %23 = sbr.rel (0) target = $region9
    $region8: #{tpu_custom_call.1} parent=1 // pred_region
      %25 = vsyncadd [#allocation6], 0
      %s26 = sshll.u32 %s1, 4
      %s27 = int_to_ptr.hbm [resolvable:$true] %s26
      %s28 = sshll.u32 [#allocation5], 4
      %s29 = int_to_ptr.vmem [resolvable:$true] %s28
      %34 = dma.hbm_to_vmem [thread:$0]  %s27, 12544, %s29, [#allocation6], 128, 128, 8
    $region9: #{tpu_custom_call.1} parent=1 // pred_fallthru
      _
    // Predicated region
    $region10: #{tpu_custom_call.1} parent=1 // pred_check
      _
    $region11: #{tpu_custom_call.1} parent=1 // pred_check_branch
      %36 = sbr.rel (0) target = $region13
    $region12: #{tpu_custom_call.1} parent=1 // pred_region
      _
    $region13: #{tpu_custom_call.1} parent=1 // pred_fallthru
      _
    // Predicated region
    $region14: #{tpu_custom_call.1} parent=1 // pred_check
      _
    $region15: #{tpu_custom_call.1} parent=1 // pred_check_branch
      %38 = sbr.rel (0) target = $region17
    $region16: #{tpu_custom_call.1} parent=1 // pred_region
      %40 = dma.done [#allocation3], 896
    $region17: #{tpu_custom_call.1} parent=1 // pred_fallthru
      _
    // Predicated region
    $region18: #{tpu_custom_call.1} parent=1 // pred_check
      _
    $region19: #{tpu_custom_call.1} parent=1 // pred_check_branch
      %42 = sbr.rel (0) target = $region21
    $region20: #{tpu_custom_call.1} parent=1 // pred_region
      %44 = dma.done [#allocation6], 12544
    $region21: #{tpu_custom_call.1} parent=1 // pred_fallthru
      _
    %v45 = vld [vmem:[#allocation2] sm:$0xff]
    %v46 = vld [vmem:[#allocation2 + $0x8] sm:$0xff]
    %v47 = vld [vmem:[#allocation2 + $0x10] sm:$0xff]
    %v48 = vld [vmem:[#allocation2 + $0x18] sm:$0xff]
    %v49 = vld [vmem:[#allocation2 + $0x20] sm:$0xff]
    %v50 = vld [vmem:[#allocation2 + $0x28] sm:$0xff]
    %v51 = vld [vmem:[#allocation2 + $0x30] sm:$0xff]
    %v52 = vld [vmem:[#allocation5] sm:$0xff]
    %v53 = vld [vmem:[#allocation5 + $0x8] sm:$0xff]
    %v54 = vld [vmem:[#allocation5 + $0x10] sm:$0xff]
    %v55 = vld [vmem:[#allocation5 + $0x18] sm:$0xff]
    %v56 = vld [vmem:[#allocation5 + $0x20] sm:$0xff]
    %v57 = vld [vmem:[#allocation5 + $0x28] sm:$0xff]
    %v58 = vld [vmem:[#allocation5 + $0x30] sm:$0xff]
    %v59 = vld [vmem:[#allocation5 + $0x38] sm:$0xff]
    %v60 = vld [vmem:[#allocation5 + $0x40] sm:$0xff]
    %v61 = vld [vmem:[#allocation5 + $0x48] sm:$0xff]
    %v62 = vld [vmem:[#allocation5 + $0x50] sm:$0xff]
    %v63 = vld [vmem:[#allocation5 + $0x58] sm:$0xff]
    %v64 = vld [vmem:[#allocation5 + $0x60] sm:$0xff]
    %v65 = vld [vmem:[#allocation5 + $0x68] sm:$0xff]
    %v66 = vld [vmem:[#allocation5 + $0x70] sm:$0xff]
    %v67 = vld [vmem:[#allocation5 + $0x78] sm:$0xff]
    %v68 = vld [vmem:[#allocation5 + $0x80] sm:$0xff]
    %v69 = vld [vmem:[#allocation5 + $0x88] sm:$0xff]
    %v70 = vld [vmem:[#allocation5 + $0x90] sm:$0xff]
    %v71 = vld [vmem:[#allocation5 + $0x98] sm:$0xff]
    %v72 = vld [vmem:[#allocation5 + $0xa0] sm:$0xff]
    %v73 = vld [vmem:[#allocation5 + $0xa8] sm:$0xff]
    %v74 = vld [vmem:[#allocation5 + $0xb0] sm:$0xff]
    %v75 = vld [vmem:[#allocation5 + $0xb8] sm:$0xff]
    %v76 = vld [vmem:[#allocation5 + $0xc0] sm:$0xff]
    %v77 = vld [vmem:[#allocation5 + $0xc8] sm:$0xff]
    %v78 = vld [vmem:[#allocation5 + $0xd0] sm:$0xff]
    %v79 = vld [vmem:[#allocation5 + $0xd8] sm:$0xff]
    %v80 = vld [vmem:[#allocation5 + $0xe0] sm:$0xff]
    %v81 = vld [vmem:[#allocation5 + $0xe8] sm:$0xff]
    %v82 = vld [vmem:[#allocation5 + $0xf0] sm:$0xff]
    %v83 = vld [vmem:[#allocation5 + $0xf8] sm:$0xff]
    %v84 = vld [vmem:[#allocation5 + $0x100] sm:$0xff]
    %v85 = vld [vmem:[#allocation5 + $0x108] sm:$0xff]
    %v86 = vld [vmem:[#allocation5 + $0x110] sm:$0xff]
    %v87 = vld [vmem:[#allocation5 + $0x118] sm:$0xff]
    %v88 = vld [vmem:[#allocation5 + $0x120] sm:$0xff]
    %v89 = vld [vmem:[#allocation5 + $0x128] sm:$0xff]
    %v90 = vld [vmem:[#allocation5 + $0x130] sm:$0xff]
    %v91 = vld [vmem:[#allocation5 + $0x138] sm:$0xff]
    %v92 = vld [vmem:[#allocation5 + $0x140] sm:$0xff]
    %v93 = vld [vmem:[#allocation5 + $0x148] sm:$0xff]
    %v94 = vld [vmem:[#allocation5 + $0x150] sm:$0xff]
    %v95 = vld [vmem:[#allocation5 + $0x158] sm:$0xff]
    %v96 = vld [vmem:[#allocation5 + $0x160] sm:$0xff]
    %v97 = vld [vmem:[#allocation5 + $0x168] sm:$0xff]
    %v98 = vld [vmem:[#allocation5 + $0x170] sm:$0xff]
    %v99 = vld [vmem:[#allocation5 + $0x178] sm:$0xff]
    %v100 = vld [vmem:[#allocation5 + $0x180] sm:$0xff]
    %v101 = vld [vmem:[#allocation5 + $0x188] sm:$0xff]
    %v102 = vld [vmem:[#allocation5 + $0x190] sm:$0xff]
    %v103 = vld [vmem:[#allocation5 + $0x198] sm:$0xff]
    %v104 = vld [vmem:[#allocation5 + $0x1a0] sm:$0xff]
    %v105 = vld [vmem:[#allocation5 + $0x1a8] sm:$0xff]
    %v106 = vld [vmem:[#allocation5 + $0x1b0] sm:$0xff]
    %v107 = vld [vmem:[#allocation5 + $0x1b8] sm:$0xff]
    %v108 = vld [vmem:[#allocation5 + $0x1c0] sm:$0xff]
    %v109 = vld [vmem:[#allocation5 + $0x1c8] sm:$0xff]
    %v110 = vld [vmem:[#allocation5 + $0x1d0] sm:$0xff]
    %v111 = vld [vmem:[#allocation5 + $0x1d8] sm:$0xff]
    %v112 = vld [vmem:[#allocation5 + $0x1e0] sm:$0xff]
    %v113 = vld [vmem:[#allocation5 + $0x1e8] sm:$0xff]
    %v114 = vld [vmem:[#allocation5 + $0x1f0] sm:$0xff]
    %v115 = vld [vmem:[#allocation5 + $0x1f8] sm:$0xff]
    %v116 = vld [vmem:[#allocation5 + $0x200] sm:$0xff]
    %v117 = vld [vmem:[#allocation5 + $0x208] sm:$0xff]
    %v118 = vld [vmem:[#allocation5 + $0x210] sm:$0xff]
    %v119 = vld [vmem:[#allocation5 + $0x218] sm:$0xff]
    %v120 = vld [vmem:[#allocation5 + $0x220] sm:$0xff]
    %v121 = vld [vmem:[#allocation5 + $0x228] sm:$0xff]
    %v122 = vld [vmem:[#allocation5 + $0x230] sm:$0xff]
    %v123 = vld [vmem:[#allocation5 + $0x238] sm:$0xff]
    %v124 = vld [vmem:[#allocation5 + $0x240] sm:$0xff]
    %v125 = vld [vmem:[#allocation5 + $0x248] sm:$0xff]
    %v126 = vld [vmem:[#allocation5 + $0x250] sm:$0xff]
    %v127 = vld [vmem:[#allocation5 + $0x258] sm:$0xff]
    %v128 = vld [vmem:[#allocation5 + $0x260] sm:$0xff]
    %v129 = vld [vmem:[#allocation5 + $0x268] sm:$0xff]
    %v130 = vld [vmem:[#allocation5 + $0x270] sm:$0xff]
    %v131 = vld [vmem:[#allocation5 + $0x278] sm:$0xff]
    %v132 = vld [vmem:[#allocation5 + $0x280] sm:$0xff]
    %v133 = vld [vmem:[#allocation5 + $0x288] sm:$0xff]
    %v134 = vld [vmem:[#allocation5 + $0x290] sm:$0xff]
    %v135 = vld [vmem:[#allocation5 + $0x298] sm:$0xff]
    %v136 = vld [vmem:[#allocation5 + $0x2a0] sm:$0xff]
    %v137 = vld [vmem:[#allocation5 + $0x2a8] sm:$0xff]
    %v138 = vld [vmem:[#allocation5 + $0x2b0] sm:$0xff]
    %v139 = vld [vmem:[#allocation5 + $0x2b8] sm:$0xff]
    %v140 = vld [vmem:[#allocation5 + $0x2c0] sm:$0xff]
    %v141 = vld [vmem:[#allocation5 + $0x2c8] sm:$0xff]
    %v142 = vld [vmem:[#allocation5 + $0x2d0] sm:$0xff]
    %v143 = vld [vmem:[#allocation5 + $0x2d8] sm:$0xff]
    %v144 = vld [vmem:[#allocation5 + $0x2e0] sm:$0xff]
    %v145 = vld [vmem:[#allocation5 + $0x2e8] sm:$0xff]
    %v146 = vld [vmem:[#allocation5 + $0x2f0] sm:$0xff]
    %v147 = vld [vmem:[#allocation5 + $0x2f8] sm:$0xff]
    %v148 = vld [vmem:[#allocation5 + $0x300] sm:$0xff]
    %v149 = vld [vmem:[#allocation5 + $0x308] sm:$0xff]
    %v150 = vld [vmem:[%s2] sm:$0x1]
    %v152 = vperm.slane %v150, 0
    %vm154 = vcmask 130048
    %v156 = vsel %vm154, %v51, 0
    %158 = vmatpush.msra.mxu0 %v67
    %159 = vmatpush.msra.mxu0 %v66
    %160 = vmatpush.msra.mxu0 %v65
    %161 = vmatpush.msra.mxu0 %v64
    %162 = vmatpush.msra.mxu0 %v63
    %163 = vmatpush.msra.mxu0 %v62
    %164 = vmatpush.msra.mxu0 %v61
    %165 = vmatpush.msra.mxu0 %v60
    %166 = vmatpush.msra.mxu0 %v59
    %167 = vmatpush.msra.mxu0 %v58
    %168 = vmatpush.msra.mxu0 %v57
    %169 = vmatpush.msra.mxu0 %v56
    %170 = vmatpush.msra.mxu0 %v55
    %171 = vmatpush.msra.mxu0 %v54
    %172 = vmatpush.msra.mxu0 %v53
    %173 = vmatpush.msra.mxu0 %v52
    %174 = vmatmul.f32.gmra.mxu0 %v45
    %v175 = vpop.f32.mrf.mxu0
    %v176 = vadd.f32 %v152, %v175
    %177 = vdwg.mxu0
    %178 = vmatpush.msra.mxu0 %v83
    %179 = vmatpush.msra.mxu0 %v82
    %180 = vmatpush.msra.mxu0 %v81
    %181 = vmatpush.msra.mxu0 %v80
    %182 = vmatpush.msra.mxu0 %v79
    %183 = vmatpush.msra.mxu0 %v78
    %184 = vmatpush.msra.mxu0 %v77
    %185 = vmatpush.msra.mxu0 %v76
    %186 = vmatpush.msra.mxu0 %v75
    %187 = vmatpush.msra.mxu0 %v74
    %188 = vmatpush.msra.mxu0 %v73
    %189 = vmatpush.msra.mxu0 %v72
    %190 = vmatpush.msra.mxu0 %v71
    %191 = vmatpush.msra.mxu0 %v70
    %192 = vmatpush.msra.mxu0 %v69
    %193 = vmatpush.msra.mxu0 %v68
    %194 = vmatmul.f32.gmra.mxu0 %v46
    %v195 = vpop.f32.mrf.mxu0
    %v196 = vadd.f32 %v176, %v195
    %197 = vdwg.mxu0
    %198 = vmatpush.msra.mxu0 %v99
    %199 = vmatpush.msra.mxu0 %v98
    %200 = vmatpush.msra.mxu0 %v97
    %201 = vmatpush.msra.mxu0 %v96
    %202 = vmatpush.msra.mxu0 %v95
    %203 = vmatpush.msra.mxu0 %v94
    %204 = vmatpush.msra.mxu0 %v93
    %205 = vmatpush.msra.mxu0 %v92
    %206 = vmatpush.msra.mxu0 %v91
    %207 = vmatpush.msra.mxu0 %v90
    %208 = vmatpush.msra.mxu0 %v89
    %209 = vmatpush.msra.mxu0 %v88
    %210 = vmatpush.msra.mxu0 %v87
    %211 = vmatpush.msra.mxu0 %v86
    %212 = vmatpush.msra.mxu0 %v85
    %213 = vmatpush.msra.mxu0 %v84
    %214 = vmatmul.f32.gmra.mxu0 %v47
    %v215 = vpop.f32.mrf.mxu0
    %v216 = vadd.f32 %v196, %v215
    %217 = vdwg.mxu0
    %218 = vmatpush.msra.mxu0 %v115
    %219 = vmatpush.msra.mxu0 %v114
    %220 = vmatpush.msra.mxu0 %v113
    %221 = vmatpush.msra.mxu0 %v112
    %222 = vmatpush.msra.mxu0 %v111
    %223 = vmatpush.msra.mxu0 %v110
    %224 = vmatpush.msra.mxu0 %v109
    %225 = vmatpush.msra.mxu0 %v108
    %226 = vmatpush.msra.mxu0 %v107
    %227 = vmatpush.msra.mxu0 %v106
    %228 = vmatpush.msra.mxu0 %v105
    %229 = vmatpush.msra.mxu0 %v104
    %230 = vmatpush.msra.mxu0 %v103
    %231 = vmatpush.msra.mxu0 %v102
    %232 = vmatpush.msra.mxu0 %v101
    %233 = vmatpush.msra.mxu0 %v100
    %234 = vmatmul.f32.gmra.mxu0 %v48
    %v235 = vpop.f32.mrf.mxu0
    %v236 = vadd.f32 %v216, %v235
    %237 = vdwg.mxu0
    %238 = vmatpush.msra.mxu0 %v131
    %239 = vmatpush.msra.mxu0 %v130
    %240 = vmatpush.msra.mxu0 %v129
    %241 = vmatpush.msra.mxu0 %v128
    %242 = vmatpush.msra.mxu0 %v127
    %243 = vmatpush.msra.mxu0 %v126
    %244 = vmatpush.msra.mxu0 %v125
    %245 = vmatpush.msra.mxu0 %v124
    %246 = vmatpush.msra.mxu0 %v123
    %247 = vmatpush.msra.mxu0 %v122
    %248 = vmatpush.msra.mxu0 %v121
    %249 = vmatpush.msra.mxu0 %v120
    %250 = vmatpush.msra.mxu0 %v119
    %251 = vmatpush.msra.mxu0 %v118
    %252 = vmatpush.msra.mxu0 %v117
    %253 = vmatpush.msra.mxu0 %v116
    %254 = vmatmul.f32.gmra.mxu0 %v49
    %v255 = vpop.f32.mrf.mxu0
    %v256 = vadd.f32 %v236, %v255
    %257 = vdwg.mxu0
    %258 = vmatpush.msra.mxu0 %v147
    %259 = vmatpush.msra.mxu0 %v146
    %260 = vmatpush.msra.mxu0 %v145
    %261 = vmatpush.msra.mxu0 %v144
    %262 = vmatpush.msra.mxu0 %v143
    %263 = vmatpush.msra.mxu0 %v142
    %264 = vmatpush.msra.mxu0 %v141
    %265 = vmatpush.msra.mxu0 %v140
    %266 = vmatpush.msra.mxu0 %v139
    %267 = vmatpush.msra.mxu0 %v138
    %268 = vmatpush.msra.mxu0 %v137
    %269 = vmatpush.msra.mxu0 %v136
    %270 = vmatpush.msra.mxu0 %v135
    %271 = vmatpush.msra.mxu0 %v134
    %272 = vmatpush.msra.mxu0 %v133
    %273 = vmatpush.msra.mxu0 %v132
    %274 = vmatmul.f32.gmra.mxu0 %v50
    %v275 = vpop.f32.mrf.mxu0
    %v276 = vadd.f32 %v256, %v275
    %277 = vdwg.mxu0
    %278 = vmatpush.msra.mxu0 0.0
    %279 = vmatpush.msra.mxu0 0.0
    %280 = vmatpush.msra.mxu0 0.0
    %281 = vmatpush.msra.mxu0 0.0
    %282 = vmatpush.msra.mxu0 0.0
    %283 = vmatpush.msra.mxu0 0.0
    %284 = vmatpush.msra.mxu0 0.0
    %285 = vmatpush.msra.mxu0 0.0
    %286 = vmatpush.msra.mxu0 0.0
    %287 = vmatpush.msra.mxu0 0.0
    %288 = vmatpush.msra.mxu0 0.0
    %289 = vmatpush.msra.mxu0 0.0
    %290 = vmatpush.msra.mxu0 0.0
    %291 = vmatpush.msra.mxu0 0.0
    %292 = vmatpush.msra.mxu0 %v149
    %293 = vmatpush.msra.mxu0 %v148
    %294 = vmatmul.f32.gmra.mxu0 %v156
    %v295 = vpop.f32.mrf.mxu0
    %v296 = vadd.f32 %v276, %v295
    %297 = vdwg.mxu0
    %298 = vmax.xlane.f32.xlu0 %v296
    %v299 = vpop.xlane.xlu0 %298
    %v300 = vsub.f32 %v296, %v299
    %v301 = vmul.f32 %v300, 1.442695
    %v302 = vpow.pop %v301
    %303 = vadd.xlane.f32.xlu0 %v302
    %v304 = vpop.xlane.xlu0 %303
    %v305 = vrcp.pop %v304
    %v306 = vmul.f32 %v304, %v305
    %v307 = vsub.f32 1.0, %v306
    %v308 = vmul.f32 %v305, %v307
    %v309 = vadd.f32 %v305, %v308
    %vm310 = vweird.f32 %v304
    %vm311 = vweird.f32 %v305
    %vm312 = vmor %vm310, %vm311
    %v313 = vsel %vm312, %v305, %v309
    %v314 = vand.u32 2147483647, %v304
    %vm315 = vcmp.eq.f32.partialorder %v314, 8.507059e+37
    %v316 = vand.u32 %v304, 2147483648
    %v317 = vor.u32 1.1754944e-38, %v316
    %v318 = vsel %vm315, %v317, %v313
    %v319 = vmul.f32 %v302, %v318
    %vm320 = vcmask 80896
    %321 = vst.msk [vmem:[#allocation7] sm:$0xff] %vm320, %v319
    // Predicated region
    $region22: #{tpu_custom_call.1} parent=1 // pred_check
      _
    $region23: #{tpu_custom_call.1} parent=1 // pred_check_branch
      %323 = sbr.rel (0) target = $region25
    $region24: #{tpu_custom_call.1} parent=1 // pred_region
      %325 = vsyncadd [#allocation4], 0
      %s327 = sshll.u32 [#allocation7], 4
      %s328 = int_to_ptr.vmem [resolvable:$true] %s327
      %s329 = sshll.u32 %s3, 4
      %s330 = int_to_ptr.hbm [resolvable:$true] %s329
      %332 = dma.vmem_to_hbm [thread:$0]  %s328, 128, %s330, [#allocation4]
    $region25: #{tpu_custom_call.1} parent=1 // pred_fallthru
      _
    // Predicated region
    $region26: #{tpu_custom_call.1} parent=1 // pred_check
      _
    $region27: #{tpu_custom_call.1} parent=1 // pred_check_branch
      %334 = sbr.rel (0) target = $region29
    $region28: #{tpu_custom_call.1} parent=1 // pred_region
      %336 = dma.done [#allocation4], 128
    $region29: #{tpu_custom_call.1} parent=1 // pred_fallthru
      _
    %337 = vsyncpa [#allocation3], 1
    %338 = vsyncpa [#allocation6], 1
    %339 = vsyncpa [#allocation4], 1

</llo_original>
